<compile_context>
chip_gen: v5e
topology: v5e:2x2
jax: 0.10.0
libtpu: 0.0.40
codegen_flags: <defaults>
</compile_context>

<pallas_src>
import jax
import jax.numpy as jnp
from jax.experimental import pallas as pl
from jax.experimental.pallas import tpu as pltpu


def _round_up(n, m):
    return ((n + m - 1) // m) * m


def _choose_tile(batch, block_b):
    """Batch tile: multiple of 16 (bf16 sublane packing), <= block_b, and small
    enough that there are >=2 tiles when the batch allows it (keeps both v7x
    TensorCores busy; harmless on single-TC v5e/v6e)."""
    tb = min(_round_up(block_b, 16), _round_up(max(pl.cdiv(batch, 2), 1), 16))
    return max(tb, 16)


def _value_net_kernel(x_ref, w1_ref, b1_ref, w2_ref, b2_ref, w3_ref, b3_ref,
                      out_ref):
    # fc1 + ReLU: cast the streamed f32 x tile to bf16 in-kernel, MXU matmul
    # with f32 accumulation, f32 bias + ReLU.
    x = x_ref[...].astype(jnp.bfloat16)
    h1 = jnp.dot(x, w1_ref[...], preferred_element_type=jnp.float32)
    h1 = jnp.maximum(h1 + b1_ref[...], 0.0)
    # fc2 + ReLU: activations back to bf16 for the MXU, f32 accumulation.
    h2 = jnp.dot(h1.astype(jnp.bfloat16), w2_ref[...],
                 preferred_element_type=jnp.float32)
    h2 = jnp.maximum(h2 + b2_ref[...], 0.0)
    # fc3 (out_dim = 1): broadcast-multiply (VPU) + lane reduction (XLU) in f32;
    # result is a lane-dense (tb,) vector written with an unmasked store.
    v = jnp.sum(h2 * w3_ref[...], axis=-1) + b3_ref[0, 0]
    out_ref[...] = v.reshape(out_ref.shape).astype(out_ref.dtype)


def prepare_params(params):
    """One-time pack of parameters into kernel-ready layout (call once, reuse).

    Accepts (w1, b1, w2, b2, w3, b3) with w stored as (in, out) and b as
    (1, out) or (out,).  Returns bf16 weights for the MXU, f32 biases, a
    lane-dense f32 w3 row and a (1, 1) f32 b3 scalar destined for SMEM.
    """
    w1, b1, w2, b2, w3, b3 = params
    H = w1.shape[1]
    return (
        jnp.asarray(w1, jnp.float32).astype(jnp.bfloat16),      # (D, H)
        jnp.asarray(b1, jnp.float32).reshape(1, H),              # (1, H)
        jnp.asarray(w2, jnp.float32).astype(jnp.bfloat16),      # (H, H)
        jnp.asarray(b2, jnp.float32).reshape(1, H),              # (1, H)
        jnp.asarray(w3, jnp.float32).reshape(1, H),              # (1, H) row
        jnp.asarray(b3, jnp.float32).reshape(1, 1),              # (1, 1) SMEM
    )


def value_network_forward(x, prepared_params, *, block_b=1024):
    """x: (B, input_dim) float32. Returns (B, 1) float32."""
    w1_bf, b1, w2_bf, b2, w3_row, b3_s = prepared_params
    B, D = x.shape
    H = w1_bf.shape[1]                      # 128

    tb = _choose_tile(B, block_b)
    n_tiles = pl.cdiv(B, tb)
    b_pad = n_tiles * tb
    if b_pad != B:                          # only pad when not tile-aligned
        x = jnp.pad(x, ((0, b_pad - B), (0, 0)))

    resident = lambda shape: pl.BlockSpec(shape, lambda i: (0, 0))

    # VMEM footprint at default tb=1024, D=32 is well under the scoped default
    # (x double-buffer ~256 KiB, h1/h2 ~1 MiB, weights ~64 KiB).  If sweeping
    # tb >= 4K or with large input_dim, add vmem_limit_bytes to CompilerParams.
    out_tiled = pl.pallas_call(
        _value_net_kernel,
        out_shape=jax.ShapeDtypeStruct((n_tiles, 1, tb), jnp.float32),
        grid_spec=pltpu.PrefetchScalarGridSpec(
            num_scalar_prefetch=0,
            grid=(n_tiles,),
            in_specs=[
                pl.BlockSpec((tb, D), lambda i: (i, 0)),             # x (pipelined)
                resident((D, H)),                                    # W1 (resident)
                resident((1, H)),                                    # b1
                resident((H, H)),                                    # W2
                resident((1, H)),                                    # b2
                resident((1, H)),                                    # w3 row
                pl.BlockSpec(memory_space=pltpu.MemorySpace.SMEM),   # b3 scalar
            ],
            out_specs=pl.BlockSpec((1, 1, tb), lambda i: (i, 0, 0)),  # lane-dense
        ),
        compiler_params=pltpu.CompilerParams(
            dimension_semantics=("parallel",),
        ),
    )(x, w1_bf, b1, w2_bf, b2, w3_row, b3_s)

    # (n_tiles, 1, tb) -> (B, 1); padded tail rows are garbage and discarded here.
    return out_tiled.reshape(b_pad)[:B].reshape(B, 1)


def init_params(key, input_dim, hidden=128, out_dim=1):
    """Deterministic init mimicking nn.Linear's uniform(-1/sqrt(fan_in), ...)."""
    keys = jax.random.split(key, 6)

    def lin(kw, kb, fan_in, fan_out):
        bound = 1.0 / jnp.sqrt(fan_in)
        # stored as (in, out) so the kernel computes x @ W
        w = jax.random.uniform(kw, (fan_in, fan_out), jnp.float32, -bound, bound)
        b = jax.random.uniform(kb, (1, fan_out), jnp.float32, -bound, bound)
        return w, b

    w1, b1 = lin(keys[0], keys[1], input_dim, hidden)
    w2, b2 = lin(keys[2], keys[3], hidden, hidden)
    w3, b3 = lin(keys[4], keys[5], hidden, out_dim)
    return (w1, b1, w2, b2, w3, b3)


if __name__ == "__main__":
    key = jax.random.PRNGKey(0)
    k_x, k_p = jax.random.split(key)

    batch, input_dim = 40, 32          # tb=32 -> 2 tiles, exercises pad + multi-tile
    x = jax.random.normal(k_x, (batch, input_dim), jnp.float32)
    params = init_params(k_p, input_dim)
    prepared = prepare_params(params)   # one-time bf16 cast / repack (hoisted)

    out = value_network_forward(x, prepared)
    out = jax.block_until_ready(out)
    assert out.shape == (batch, 1)

    w1, b1, w2, b2, w3, b3 = params

    # Reference 1: mirrors the kernel's bf16-operand / f32-accumulate math.
    h1 = jnp.maximum(jnp.dot(x.astype(jnp.bfloat16), w1.astype(jnp.bfloat16),
                             preferred_element_type=jnp.float32) + b1, 0.0)
    h2 = jnp.maximum(jnp.dot(h1.astype(jnp.bfloat16), w2.astype(jnp.bfloat16),
                             preferred_element_type=jnp.float32) + b2, 0.0)
    ref_bf = jnp.sum(h2 * w3[:, 0][None, :], axis=-1, keepdims=True) + b3
    assert jnp.allclose(out, ref_bf, atol=2e-3, rtol=2e-3), \
        float(jnp.max(jnp.abs(out - ref_bf)))

    # Reference 2: pure f32 PyTorch-equivalent forward (loose bf16 tolerance).
    ref32 = jnp.maximum(x @ w1 + b1, 0.0)
    ref32 = jnp.maximum(ref32 @ w2 + b2, 0.0)
    ref32 = ref32 @ w3 + b3
    assert jnp.allclose(out, ref32, atol=5e-2, rtol=5e-2), \
        float(jnp.max(jnp.abs(out - ref32)))

    print("KERNEL_OK")
</pallas_src>

<mosaic_0001>
module attributes {stable_mosaic.version = 11 : i64} {
  func.func @_value_net_kernel(%arg0: i32, %arg1: memref<32x32xf32, #tpu.memory_space<vmem>>, %arg2: memref<32x128xbf16, #tpu.memory_space<vmem>>, %arg3: memref<1x128xf32, #tpu.memory_space<vmem>>, %arg4: memref<128x128xbf16, #tpu.memory_space<vmem>>, %arg5: memref<1x128xf32, #tpu.memory_space<vmem>>, %arg6: memref<1x128xf32, #tpu.memory_space<vmem>>, %arg7: memref<1x1xf32, #tpu.memory_space<smem>>, %arg8: memref<1x1x32xf32, #tpu.memory_space<vmem>>) attributes {dimension_semantics = [#tpu.dimension_semantics<parallel>], iteration_bounds = array<i64: 2>, scalar_prefetch = 0 : i64, scratch_operands = 0 : i64, tpu.core_type = #tpu.core_type<tc>, window_params = [{transform_indices = @transform_0, window_bounds = array<i64: 32, 32>}, {pipeline_mode = #tpu.pipeline_mode<synchronous>, transform_indices = @transform_1, window_bounds = array<i64: 32, 128>}, {pipeline_mode = #tpu.pipeline_mode<synchronous>, transform_indices = @transform_2, window_bounds = array<i64: 1, 128>}, {pipeline_mode = #tpu.pipeline_mode<synchronous>, transform_indices = @transform_3, window_bounds = array<i64: 128, 128>}, {pipeline_mode = #tpu.pipeline_mode<synchronous>, transform_indices = @transform_4, window_bounds = array<i64: 1, 128>}, {pipeline_mode = #tpu.pipeline_mode<synchronous>, transform_indices = @transform_5, window_bounds = array<i64: 1, 128>}, {transform_indices = @transform_6, window_bounds = array<i64: 1, 1>}, {transform_indices = @transform_7, window_bounds = array<i64: 1, 1, 32>}]} {
    %c0 = arith.constant 0 : index
    %c0_0 = arith.constant 0 : index
    %0 = vector.load %arg1[%c0, %c0_0] : memref<32x32xf32, #tpu.memory_space<vmem>>, vector<32x32xf32>
    %1 = arith.truncf %0 : vector<32x32xf32> to vector<32x32xbf16>
    %c0_1 = arith.constant 0 : index
    %c0_2 = arith.constant 0 : index
    %2 = vector.load %arg2[%c0_1, %c0_2] : memref<32x128xbf16, #tpu.memory_space<vmem>>, vector<32x128xbf16>
    %cst = arith.constant dense<0.000000e+00> : vector<32x128xf32>
    %3 = tpu.matmul %1, %2, %cst {dimension_numbers = #tpu.dot_dimension_numbers<[1], [0], [0], [1], [0, 0, 1, 1], [], []>} : vector<32x32xbf16>, vector<32x128xbf16>, vector<32x128xf32> -> vector<32x128xf32>
    %c0_3 = arith.constant 0 : index
    %c0_4 = arith.constant 0 : index
    %4 = vector.load %arg3[%c0_3, %c0_4] : memref<1x128xf32, #tpu.memory_space<vmem>>, vector<1x128xf32>
    %5 = vector.broadcast %4 : vector<1x128xf32> to vector<32x128xf32>
    %6 = arith.addf %3, %5 : vector<32x128xf32>
    %cst_5 = arith.constant 0.000000e+00 : f32
    %7 = vector.broadcast %cst_5 : f32 to vector<32x128xf32>
    %8 = arith.maximumf %6, %7 : vector<32x128xf32>
    %9 = arith.truncf %8 : vector<32x128xf32> to vector<32x128xbf16>
    %c0_6 = arith.constant 0 : index
    %c0_7 = arith.constant 0 : index
    %10 = vector.load %arg4[%c0_6, %c0_7] : memref<128x128xbf16, #tpu.memory_space<vmem>>, vector<128x128xbf16>
    %cst_8 = arith.constant dense<0.000000e+00> : vector<32x128xf32>
    %11 = tpu.matmul %9, %10, %cst_8 {dimension_numbers = #tpu.dot_dimension_numbers<[1], [0], [0], [1], [0, 0, 1, 1], [], []>} : vector<32x128xbf16>, vector<128x128xbf16>, vector<32x128xf32> -> vector<32x128xf32>
    %c0_9 = arith.constant 0 : index
    %c0_10 = arith.constant 0 : index
    %12 = vector.load %arg5[%c0_9, %c0_10] : memref<1x128xf32, #tpu.memory_space<vmem>>, vector<1x128xf32>
    %13 = vector.broadcast %12 : vector<1x128xf32> to vector<32x128xf32>
    %14 = arith.addf %11, %13 : vector<32x128xf32>
    %cst_11 = arith.constant 0.000000e+00 : f32
    %15 = vector.broadcast %cst_11 : f32 to vector<32x128xf32>
    %16 = arith.maximumf %14, %15 : vector<32x128xf32>
    %c0_12 = arith.constant 0 : index
    %c0_13 = arith.constant 0 : index
    %17 = vector.load %arg6[%c0_12, %c0_13] : memref<1x128xf32, #tpu.memory_space<vmem>>, vector<1x128xf32>
    %18 = vector.broadcast %17 : vector<1x128xf32> to vector<32x128xf32>
    %19 = arith.mulf %16, %18 : vector<32x128xf32>
    %cst_14 = arith.constant dense<0.000000e+00> : vector<32xf32>
    %20 = vector.multi_reduction <add>, %19, %cst_14 [1] : vector<32x128xf32> to vector<32xf32>
    %c0_15 = arith.constant 0 : index
    %c0_16 = arith.constant 0 : index
    %21 = memref.load %arg7[%c0_15, %c0_16] : memref<1x1xf32, #tpu.memory_space<smem>>
    %22 = vector.broadcast %21 : f32 to vector<32xf32>
    %23 = arith.addf %20, %22 : vector<32xf32>
    %24 = vector.shape_cast %23 : vector<32xf32> to vector<1x1x32xf32>
    %c0_17 = arith.constant 0 : index
    %c0_18 = arith.constant 0 : index
    %c0_19 = arith.constant 0 : index
    %25 = vector.load %arg8[%c0_17, %c0_18, %c0_19] : memref<1x1x32xf32, #tpu.memory_space<vmem>>, vector<1x1x32xf32>
    tpu.vector_store %arg8[%c0_17, %c0_18, %c0_19], %24 {strides = array<i32>} : memref<1x1x32xf32, #tpu.memory_space<vmem>>, vector<1x1x32xf32>,
    return
  }
  func.func @transform_0(%arg0: i32) -> (i32, i32) {
    %c0_i32 = arith.constant 0 : i32
    %c0_i32_0 = arith.constant 0 : i32
    return %arg0, %c0_i32 : i32, i32
  }
  func.func @transform_1(%arg0: i32) -> (i32, i32) {
    %c0_i32 = arith.constant 0 : i32
    %c0_i32_0 = arith.constant 0 : i32
    %c0_i32_1 = arith.constant 0 : i32
    return %c0_i32, %c0_i32_0 : i32, i32
  }
  func.func @transform_2(%arg0: i32) -> (i32, i32) {
    %c0_i32 = arith.constant 0 : i32
    %c0_i32_0 = arith.constant 0 : i32
    %c0_i32_1 = arith.constant 0 : i32
    return %c0_i32, %c0_i32_0 : i32, i32
  }
  func.func @transform_3(%arg0: i32) -> (i32, i32) {
    %c0_i32 = arith.constant 0 : i32
    %c0_i32_0 = arith.constant 0 : i32
    %c0_i32_1 = arith.constant 0 : i32
    return %c0_i32, %c0_i32_0 : i32, i32
  }
  func.func @transform_4(%arg0: i32) -> (i32, i32) {
    %c0_i32 = arith.constant 0 : i32
    %c0_i32_0 = arith.constant 0 : i32
    %c0_i32_1 = arith.constant 0 : i32
    return %c0_i32, %c0_i32_0 : i32, i32
  }
  func.func @transform_5(%arg0: i32) -> (i32, i32) {
    %c0_i32 = arith.constant 0 : i32
    %c0_i32_0 = arith.constant 0 : i32
    %c0_i32_1 = arith.constant 0 : i32
    return %c0_i32, %c0_i32_0 : i32, i32
  }
  func.func @transform_6(%arg0: i32) -> (i32, i32) {
    %c0_i32 = arith.constant 0 : i32
    %c0_i32_0 = arith.constant 0 : i32
    %c0_i32_1 = arith.constant 0 : i32
    return %c0_i32, %c0_i32_0 : i32, i32
  }
  func.func @transform_7(%arg0: i32) -> (i32, i32, i32) {
    %c0_i32 = arith.constant 0 : i32
    %c0_i32_0 = arith.constant 0 : i32
    %c0_i32_1 = arith.constant 0 : i32
    return %arg0, %c0_i32, %c0_i32_0 : i32, i32, i32
  }
}

</mosaic_0001>

<llo_original>
// kernel: tpu_custom_call.1
$region0: #{tpu_custom_call.1}
  #allocation0 [shape = 'u32[]', space=smem, size = 0x4, offset = 0x4, fixed_abs, tag = 'smem constant byte address 0x4 - core index']
  #allocation1 [shape = 'u32[72,128]{1,0:T(1,128)}', space=vmem, size = 0x9000, scoped, tag = 'internal scratch']
  #allocation2 [shape = 'f32[1,1]{1,0:T(1,128)S(6)}', space=smem, size = 0x200, scoped, tag = 'scoped memory for tpu_custom_call.1']
  %s0 = inlined_call_operand.vmem [shape: f32[64,32], index: 0, kind: input, shape index: {}]
  %s1 = inlined_call_operand.vmem [shape: bf16[32,128], index: 1, kind: input, shape index: {}]
  %s2 = inlined_call_operand.vmem [shape: f32[1,128], index: 2, kind: input, shape index: {}]
  %s3 = inlined_call_operand.vmem [shape: bf16[128,128], index: 3, kind: input, shape index: {}]
  %s4 = inlined_call_operand.vmem [shape: f32[1,128], index: 4, kind: input, shape index: {}]
  %s5 = inlined_call_operand.vmem [shape: f32[1,128], index: 5, kind: input, shape index: {}]
  %s6 = inlined_call_operand.<no memory space> [shape: f32[1,1], index: 6, kind: input, shape index: {}]
  %s7 = inlined_call_operand.hbm [shape: f32[2,1,32], index: 7, kind: output, shape index: {}]
  %s8 = sld [smem:[#allocation0]]
  $region61: #{tpu_custom_call.1} parent=0
    _
  %s10 = ssub.s32 1, %s8
  %s11 = scalar_select 0, %s10, %s8
  %12 = sst [smem:[#allocation2]] %s6
  $region1: #{tpu_custom_call.1} parent=0
    #allocation3 [shape = 'u8[1024]{0}', space=vmem, size = 0x400, scoped, tag = 'output window, operand 0']
    #allocation4 [shape = 's32[2]{0}', space=sflag, size = 0x8, scoped, tag = 'scoped memory for tpu_custom_call.1']
    %13 = vsyncpa [#allocation4], 0
    %s14 = scalar_lea.sflag [#allocation4], 1
    %15 = vsyncpa %s14, 0
    loop: start=0, step=1, limit=4
    $region2: #{tpu_custom_call.1} parent=1 // loop_pre_header
      _
    $region3: #{tpu_custom_call.1} parent=1 // loop_header
      %s17 = sphi 0, %s21
      %p18 = scmp.ge.s32.totalorder %s17, 4
      %s27 = sphi 0, %s29
      %s30 = sphi 0, %s27
      %s31 = sphi 0, %s30
      %s47 = sphi 0, %s31
      %s51 = sphi 0, %s51
      %s53 = sphi 0, %s51
      %s54 = sphi 0, %s53
      %s68 = sphi 0, %s54
      %s72 = sphi 0, %s72
      %s74 = sphi 0, %s72
      %s75 = sphi 0, %s74
      %s89 = sphi 0, %s75
      %s93 = sphi 0, %s93
      %s95 = sphi 0, %s93
      %s96 = sphi 0, %s95
      %s110 = sphi 0, %s96
      %s114 = sphi 0, %s114
      %s116 = sphi 0, %s114
      %s117 = sphi 0, %s116
      %s131 = sphi 0, %s117
      %s135 = sphi 0, %s135
      %s137 = sphi 0, %s135
      %s138 = sphi 0, %s137
      %s152 = sphi 0, %s138
      %s156 = sphi 0, %s156
      %s158 = sphi 0, %s156
      %s159 = sphi 0, %s158
      %s173 = sphi 0, %s159
      %s179 = sphi 0, %s181
      %s182 = sphi 0, %s179
      %s183 = sphi 0, %s182
      %s199 = sphi 0, %s183
    $region4: #{tpu_custom_call.1} parent=1 // loop_header_branch
      %20 = sbr.rel (%p18) target = $region8
    $region5: #{tpu_custom_call.1} parent=1 // loop_body
      %s22 = ssub.s32 %s17, 1
      %s23 = ssub.s32 %s17, 2
      %s24 = sadd.s32 %s17, 1
      %s25 = ssub.s32 %s17, %s24
      %p26 = scmp.eq.s32.totalorder %s25, 0
      %s28 = sadd.s32 %s27, 1
      %s29 = scalar_select %p26, %s27, %s28
      %p32 = pneg %p26
      %p33 = scmp.eq.s32.totalorder %s17, 1
      %p34 = por %p32, %p33
      %p35 = scmp.ne.s32.totalorder %s27, %s30
      %p36 = scmp.eq.s32.totalorder %s17, 0
      %p37 = por %p35, %p36
      %p38 = scmp.ne.s32.totalorder %s27, %s30
      %p39 = scmp.eq.s32.totalorder %s22, 1
      %p40 = por %p38, %p39
      %p41 = scmp.ne.s32.totalorder %s30, %s31
      %p42 = scmp.eq.s32.totalorder %s22, 0
      %p43 = por %p41, %p42
      %p44 = scmp.ne.s32.totalorder %s30, %s31
      %p45 = scmp.eq.s32.totalorder %s23, 1
      %p46 = por %p44, %p45
      %p48 = scmp.ne.s32.totalorder %s31, %s47
      %p49 = scmp.eq.s32.totalorder %s23, 0
      %p50 = por %p48, %p49
      %s52 = sadd.s32 %s51, 1
      %p55 = scmp.eq.s32.totalorder %s17, 1
      %p56 = scmp.ne.s32.totalorder %s51, %s53
      %p57 = scmp.eq.s32.totalorder %s17, 0
      %p58 = por %p56, %p57
      %p59 = scmp.ne.s32.totalorder %s51, %s53
      %p60 = scmp.eq.s32.totalorder %s22, 1
      %p61 = por %p59, %p60
      %p62 = scmp.ne.s32.totalorder %s53, %s54
      %p63 = scmp.eq.s32.totalorder %s22, 0
      %p64 = por %p62, %p63
      %p65 = scmp.ne.s32.totalorder %s53, %s54
      %p66 = scmp.eq.s32.totalorder %s23, 1
      %p67 = por %p65, %p66
      %p69 = scmp.ne.s32.totalorder %s54, %s68
      %p70 = scmp.eq.s32.totalorder %s23, 0
      %p71 = por %p69, %p70
      %s73 = sadd.s32 %s72, 1
      %p76 = scmp.eq.s32.totalorder %s17, 1
      %p77 = scmp.ne.s32.totalorder %s72, %s74
      %p78 = scmp.eq.s32.totalorder %s17, 0
      %p79 = por %p77, %p78
      %p80 = scmp.ne.s32.totalorder %s72, %s74
      %p81 = scmp.eq.s32.totalorder %s22, 1
      %p82 = por %p80, %p81
      %p83 = scmp.ne.s32.totalorder %s74, %s75
      %p84 = scmp.eq.s32.totalorder %s22, 0
      %p85 = por %p83, %p84
      %p86 = scmp.ne.s32.totalorder %s74, %s75
      %p87 = scmp.eq.s32.totalorder %s23, 1
      %p88 = por %p86, %p87
      %p90 = scmp.ne.s32.totalorder %s75, %s89
      %p91 = scmp.eq.s32.totalorder %s23, 0
      %p92 = por %p90, %p91
      %s94 = sadd.s32 %s93, 1
      %p97 = scmp.eq.s32.totalorder %s17, 1
      %p98 = scmp.ne.s32.totalorder %s93, %s95
      %p99 = scmp.eq.s32.totalorder %s17, 0
      %p100 = por %p98, %p99
      %p101 = scmp.ne.s32.totalorder %s93, %s95
      %p102 = scmp.eq.s32.totalorder %s22, 1
      %p103 = por %p101, %p102
      %p104 = scmp.ne.s32.totalorder %s95, %s96
      %p105 = scmp.eq.s32.totalorder %s22, 0
      %p106 = por %p104, %p105
      %p107 = scmp.ne.s32.totalorder %s95, %s96
      %p108 = scmp.eq.s32.totalorder %s23, 1
      %p109 = por %p107, %p108
      %p111 = scmp.ne.s32.totalorder %s96, %s110
      %p112 = scmp.eq.s32.totalorder %s23, 0
      %p113 = por %p111, %p112
      %s115 = sadd.s32 %s114, 1
      %p118 = scmp.eq.s32.totalorder %s17, 1
      %p119 = scmp.ne.s32.totalorder %s114, %s116
      %p120 = scmp.eq.s32.totalorder %s17, 0
      %p121 = por %p119, %p120
      %p122 = scmp.ne.s32.totalorder %s114, %s116
      %p123 = scmp.eq.s32.totalorder %s22, 1
      %p124 = por %p122, %p123
      %p125 = scmp.ne.s32.totalorder %s116, %s117
      %p126 = scmp.eq.s32.totalorder %s22, 0
      %p127 = por %p125, %p126
      %p128 = scmp.ne.s32.totalorder %s116, %s117
      %p129 = scmp.eq.s32.totalorder %s23, 1
      %p130 = por %p128, %p129
      %p132 = scmp.ne.s32.totalorder %s117, %s131
      %p133 = scmp.eq.s32.totalorder %s23, 0
      %p134 = por %p132, %p133
      %s136 = sadd.s32 %s135, 1
      %p139 = scmp.eq.s32.totalorder %s17, 1
      %p140 = scmp.ne.s32.totalorder %s135, %s137
      %p141 = scmp.eq.s32.totalorder %s17, 0
      %p142 = por %p140, %p141
      %p143 = scmp.ne.s32.totalorder %s135, %s137
      %p144 = scmp.eq.s32.totalorder %s22, 1
      %p145 = por %p143, %p144
      %p146 = scmp.ne.s32.totalorder %s137, %s138
      %p147 = scmp.eq.s32.totalorder %s22, 0
      %p148 = por %p146, %p147
      %p149 = scmp.ne.s32.totalorder %s137, %s138
      %p150 = scmp.eq.s32.totalorder %s23, 1
      %p151 = por %p149, %p150
      %p153 = scmp.ne.s32.totalorder %s138, %s152
      %p154 = scmp.eq.s32.totalorder %s23, 0
      %p155 = por %p153, %p154
      %s157 = sadd.s32 %s156, 1
      %p160 = scmp.eq.s32.totalorder %s17, 1
      %p161 = scmp.ne.s32.totalorder %s156, %s158
      %p162 = scmp.eq.s32.totalorder %s17, 0
      %p163 = por %p161, %p162
      %p164 = scmp.ne.s32.totalorder %s156, %s158
      %p165 = scmp.eq.s32.totalorder %s22, 1
      %p166 = por %p164, %p165
      %p167 = scmp.ne.s32.totalorder %s158, %s159
      %p168 = scmp.eq.s32.totalorder %s22, 0
      %p169 = por %p167, %p168
      %p170 = scmp.ne.s32.totalorder %s158, %s159
      %p171 = scmp.eq.s32.totalorder %s23, 1
      %p172 = por %p170, %p171
      %p174 = scmp.ne.s32.totalorder %s159, %s173
      %p175 = scmp.eq.s32.totalorder %s23, 0
      %p176 = por %p174, %p175
      %s177 = ssub.s32 %s17, %s24
      %p178 = scmp.eq.s32.totalorder %s177, 0
      %s180 = sadd.s32 %s179, 1
      %s181 = scalar_select %p178, %s179, %s180
      %p184 = pneg %p178
      %p185 = scmp.eq.s32.totalorder %s17, 1
      %p186 = por %p184, %p185
      %p187 = scmp.ne.s32.totalorder %s179, %s182
      %p188 = scmp.eq.s32.totalorder %s17, 0
      %p189 = por %p187, %p188
      %p190 = scmp.ne.s32.totalorder %s179, %s182
      %p191 = scmp.eq.s32.totalorder %s22, 1
      %p192 = por %p190, %p191
      %p193 = scmp.ne.s32.totalorder %s182, %s183
      %p194 = scmp.eq.s32.totalorder %s22, 0
      %p195 = por %p193, %p194
      %p196 = scmp.ne.s32.totalorder %s182, %s183
      %p197 = scmp.eq.s32.totalorder %s23, 1
      %p198 = por %p196, %p197
      %p200 = scmp.ne.s32.totalorder %s183, %s199
      %p201 = scmp.eq.s32.totalorder %s23, 0
      %p202 = por %p200, %p201
      %p203 = scmp.le.s32.totalorder 1, %s17
      %p204 = scmp.lt.s32.totalorder %s17, 3
      %p205 = pnand %p203, %p204
      %p206 = pneg %p205
      // Predicated region
      $region9: #{tpu_custom_call.1} parent=5 // pred_check
        _
      $region10: #{tpu_custom_call.1} parent=5 // pred_check_branch
        %208 = sbr.rel (%p205) target = $region12
      $region11: #{tpu_custom_call.1} parent=5 // pred_region
        %s209 = ssub.s32 %s17, 1
        // Predicated region
        $region13: #{tpu_custom_call.1} parent=11 // pred_check
          %p210 = pneg %p64
        $region14: #{tpu_custom_call.1} parent=11 // pred_check_branch
          %212 = sbr.rel (%p210) target = $region16
        $region15: #{tpu_custom_call.1} parent=11 // pred_region
          _
        $region16: #{tpu_custom_call.1} parent=11 // pred_fallthru
          _
        // Predicated region
        $region17: #{tpu_custom_call.1} parent=11 // pred_check
          %p213 = pneg %p85
        $region18: #{tpu_custom_call.1} parent=11 // pred_check_branch
          %215 = sbr.rel (%p213) target = $region20
        $region19: #{tpu_custom_call.1} parent=11 // pred_region
          _
        $region20: #{tpu_custom_call.1} parent=11 // pred_fallthru
          _
        // Predicated region
        $region21: #{tpu_custom_call.1} parent=11 // pred_check
          %p216 = pneg %p106
        $region22: #{tpu_custom_call.1} parent=11 // pred_check_branch
          %218 = sbr.rel (%p216) target = $region24
        $region23: #{tpu_custom_call.1} parent=11 // pred_region
          _
        $region24: #{tpu_custom_call.1} parent=11 // pred_fallthru
          _
        // Predicated region
        $region25: #{tpu_custom_call.1} parent=11 // pred_check
          %p219 = pneg %p127
        $region26: #{tpu_custom_call.1} parent=11 // pred_check_branch
          %221 = sbr.rel (%p219) target = $region28
        $region27: #{tpu_custom_call.1} parent=11 // pred_region
          _
        $region28: #{tpu_custom_call.1} parent=11 // pred_fallthru
          _
        // Predicated region
        $region29: #{tpu_custom_call.1} parent=11 // pred_check
          %p222 = pneg %p148
        $region30: #{tpu_custom_call.1} parent=11 // pred_check_branch
          %224 = sbr.rel (%p222) target = $region32
        $region31: #{tpu_custom_call.1} parent=11 // pred_region
          _
        $region32: #{tpu_custom_call.1} parent=11 // pred_fallthru
          _
        // Predicated region
        $region33: #{tpu_custom_call.1} parent=11 // pred_check
          %p225 = pneg %p169
        $region34: #{tpu_custom_call.1} parent=11 // pred_check_branch
          %227 = sbr.rel (%p225) target = $region36
        $region35: #{tpu_custom_call.1} parent=11 // pred_region
          _
        $region36: #{tpu_custom_call.1} parent=11 // pred_fallthru
          _
      $region12: #{tpu_custom_call.1} parent=5 // pred_fallthru
        _
      %p228 = scmp.lt.s32.totalorder %s17, 2
      // Predicated region
      $region37: #{tpu_custom_call.1} parent=5 // pred_check
        %p229 = pneg %p228
      $region38: #{tpu_custom_call.1} parent=5 // pred_check_branch
        %231 = sbr.rel (%p229) target = $region40
      $region39: #{tpu_custom_call.1} parent=5 // pred_region
        // Predicated region
        $region41: #{tpu_custom_call.1} parent=39 // pred_check
          %p232 = pneg %p37
        $region42: #{tpu_custom_call.1} parent=39 // pred_check_branch
          %234 = sbr.rel (%p232) target = $region44
        $region43: #{tpu_custom_call.1} parent=39 // pred_region
          %s235 = smul.u32 4, %s17
          %p236 = scmp.lt.s32.totalorder %s235, 7
          %s237 = scalar_select %p236, %s235, 7
          %s238 = smul.addr %s237, 8
          %s239 = scalar_lea.vmem %s0, %s238
          %s240 = smul.u32 4, %s17
        $region44: #{tpu_custom_call.1} parent=39 // pred_fallthru
          _
      $region40: #{tpu_custom_call.1} parent=5 // pred_fallthru
        _
      %p241 = scmp.le.s32.totalorder 1, %s17
      %p242 = scmp.lt.s32.totalorder %s17, 3
      %p243 = pnand %p241, %p242
      %p244 = pneg %p243
      // Predicated region
      $region45: #{tpu_custom_call.1} parent=5 // pred_check
        _
      $region46: #{tpu_custom_call.1} parent=5 // pred_check_branch
        %246 = sbr.rel (%p243) target = $region48
      $region47: #{tpu_custom_call.1} parent=5 // pred_region
        %s247 = ssub.s32 %s17, 1
        %s248 = smul.u32 4, %s22
        %p249 = scmp.lt.s32.totalorder %s248, 7
        %s250 = scalar_select %p249, %s248, 7
        %s251 = smul.addr %s250, 8
        %s252 = scalar_lea.vmem %s0, %s251
        %p253 = pneg %p43
        %p254 = pneg %p40
        %p255 = pneg %p64
        %p256 = pneg %p61
        %p257 = pneg %p85
        %p258 = pneg %p82
        %p259 = pneg %p106
        %p260 = pneg %p103
        %p261 = pneg %p127
        %p262 = pneg %p124
        %p263 = pneg %p148
        %p264 = pneg %p145
        %p265 = pneg %p169
        %p266 = pneg %p166
        %p267 = pneg %p195
        %p268 = pneg %p192
        %s269 = sand.u32 %s182, 1
        %s270 = scalar_lea.sflag [#allocation4], %s269
        %s271 = sand.u32 %s182, 1
        %s272 = scalar_lea.vmem [#allocation3], %s271
        %s273 = smul.u32 4, %s22
        %p274 = scmp.lt.s32.totalorder %s273, 7
        %s275 = scalar_select %p274, %s273, 7
        %s276 = smul.addr %s275, 8
        %s277 = scalar_lea.vmem %s0, %s276
        %s278 = smul.u32 4, %s22
        %v280 = vld [vmem:[%s277] sm:$0xff]
        %v281 = vld [vmem:[%s277 + $0x8] sm:$0xff]
        %v282 = vld [vmem:[%s277 + $0x10] sm:$0xff]
        %v283 = vld [vmem:[%s277 + $0x18] sm:$0xff]
        %v284 = vpack.c.bf16 %v281, %v280
        %v285 = vpack.c.bf16 %v283, %v282
        %v286 = vld [vmem:[%s1] sm:$0xf]
        %v287 = vld [vmem:[%s1 + $0x4] sm:$0xf]
        %v288 = vld [vmem:[%s1 + $0x8] sm:$0xf]
        %v289 = vld [vmem:[%s1 + $0xc] sm:$0xf]
        %v290 = vld [vmem:[%s2] sm:$0x1]
        %v292 = vperm.slane %v290, 0
        %v298 = vunpack.c.l.b16 %v286
        %v299 = vunpack.c.l.b16 %v287
        %v300 = vunpack.c.l.b16 %v288
        %v301 = vunpack.c.l.b16 %v289
        %v302 = vpack.c.b16 %v299, %v298
        %v303 = vpack.c.b16 %v301, %v300
        %vm306 = vcmask 261120
        %v308 = vsel %vm306, %v284, 0
        %v311 = vsel %vm306, %v285, 0
        %313 = vmatpush.bf16.msra.mxu0 0
        %314 = vmatpush.bf16.msra.mxu0 0
        %315 = vmatpush.bf16.msra.mxu0 0
        %316 = vmatpush.bf16.msra.mxu0 0
        %317 = vmatpush.bf16.msra.mxu0 0
        %318 = vmatpush.bf16.msra.mxu0 0
        %319 = vmatpush.bf16.msra.mxu0 %v303
        %320 = vmatpush.bf16.msra.mxu0 %v302
        %321 = vmatmul.bf16.gmra.mxu0 %v308
        %v322 = vpop.f32.mrf.mxu0
        %v323 = vadd.f32 %v292, %v322
        %v324 = vpop.f32.mrf.mxu0
        %v325 = vadd.f32 %v292, %v324
        %326 = vmatmul.bf16.gmra.mxu0 %v311
        %v327 = vpop.f32.mrf.mxu0
        %v328 = vadd.f32 %v292, %v327
        %v329 = vpop.f32.mrf.mxu0
        %v330 = vadd.f32 %v292, %v329
        %331 = vdwg.mxu0
        %v332 = vmax.f32 %v323, 0.0
        %v333 = vmax.f32 %v325, 0.0
        %v334 = vmax.f32 %v328, 0.0
        %v335 = vmax.f32 %v330, 0.0
        %v336 = vpack.c.bf16 %v333, %v332
        %v337 = vpack.c.bf16 %v335, %v334
        %v338 = vld [vmem:[%s3] sm:$0xf]
        %v339 = vld [vmem:[%s3 + $0x4] sm:$0xf]
        %v340 = vld [vmem:[%s3 + $0x8] sm:$0xf]
        %v341 = vld [vmem:[%s3 + $0xc] sm:$0xf]
        %v342 = vld [vmem:[%s3 + $0x10] sm:$0xf]
        %v343 = vld [vmem:[%s3 + $0x14] sm:$0xf]
        %v344 = vld [vmem:[%s3 + $0x18] sm:$0xf]
        %v345 = vld [vmem:[%s3 + $0x1c] sm:$0xf]
        %v346 = vld [vmem:[%s3 + $0x20] sm:$0xf]
        %v347 = vld [vmem:[%s3 + $0x24] sm:$0xf]
        %v348 = vld [vmem:[%s3 + $0x28] sm:$0xf]
        %v349 = vld [vmem:[%s3 + $0x2c] sm:$0xf]
        %v350 = vld [vmem:[%s3 + $0x30] sm:$0xf]
        %v351 = vld [vmem:[%s3 + $0x34] sm:$0xf]
        %v352 = vld [vmem:[%s3 + $0x38] sm:$0xf]
        %v353 = vld [vmem:[%s3 + $0x3c] sm:$0xf]
        %v354 = vld [vmem:[%s4] sm:$0x1]
        %v356 = vperm.slane %v354, 0
        %v374 = vunpack.c.l.b16 %v338
        %v375 = vunpack.c.l.b16 %v339
        %v376 = vunpack.c.l.b16 %v340
        %v377 = vunpack.c.l.b16 %v341
        %v378 = vunpack.c.l.b16 %v342
        %v379 = vunpack.c.l.b16 %v343
        %v380 = vunpack.c.l.b16 %v344
        %v381 = vunpack.c.l.b16 %v345
        %v382 = vunpack.c.l.b16 %v346
        %v383 = vunpack.c.l.b16 %v347
        %v384 = vunpack.c.l.b16 %v348
        %v385 = vunpack.c.l.b16 %v349
        %v386 = vunpack.c.l.b16 %v350
        %v387 = vunpack.c.l.b16 %v351
        %v388 = vunpack.c.l.b16 %v352
        %v389 = vunpack.c.l.b16 %v353
        %v390 = vpack.c.b16 %v375, %v374
        %v391 = vpack.c.b16 %v377, %v376
        %v392 = vpack.c.b16 %v379, %v378
        %v393 = vpack.c.b16 %v381, %v380
        %v394 = vpack.c.b16 %v383, %v382
        %v395 = vpack.c.b16 %v385, %v384
        %v396 = vpack.c.b16 %v387, %v386
        %v397 = vpack.c.b16 %v389, %v388
        %406 = vmatpush.bf16.msra.mxu0 %v397
        %407 = vmatpush.bf16.msra.mxu0 %v396
        %408 = vmatpush.bf16.msra.mxu0 %v395
        %409 = vmatpush.bf16.msra.mxu0 %v394
        %410 = vmatpush.bf16.msra.mxu0 %v393
        %411 = vmatpush.bf16.msra.mxu0 %v392
        %412 = vmatpush.bf16.msra.mxu0 %v391
        %413 = vmatpush.bf16.msra.mxu0 %v390
        %414 = vmatmul.bf16.gmra.mxu0 %v336
        %v415 = vpop.f32.mrf.mxu0
        %v416 = vadd.f32 %v356, %v415
        %v417 = vpop.f32.mrf.mxu0
        %v418 = vadd.f32 %v356, %v417
        %419 = vmatmul.bf16.gmra.mxu0 %v337
        %v420 = vpop.f32.mrf.mxu0
        %v421 = vadd.f32 %v356, %v420
        %v422 = vpop.f32.mrf.mxu0
        %v423 = vadd.f32 %v356, %v422
        %424 = vdwg.mxu0
        %v425 = vmax.f32 %v416, 0.0
        %v426 = vmax.f32 %v418, 0.0
        %v427 = vmax.f32 %v421, 0.0
        %v428 = vmax.f32 %v423, 0.0
        %v429 = vld [vmem:[%s5] sm:$0x1]
        %v431 = vperm.slane %v429, 0
        %v433 = vmul.f32 %v425, %v431
        %v434 = vmul.f32 %v426, %v431
        %v435 = vmul.f32 %v427, %v431
        %v436 = vmul.f32 %v428, %v431
        %437 = vadd.xlane.f32.xlu0 %v433
        %v438 = vpop.xlane.xlu0 %437
        %439 = vadd.xlane.f32.xlu0 %v434
        %v440 = vpop.xlane.xlu0 %439
        %441 = vadd.xlane.f32.xlu0 %v435
        %v442 = vpop.xlane.xlu0 %441
        %443 = vadd.xlane.f32.xlu0 %v436
        %v444 = vpop.xlane.xlu0 %443
        %s445 = sld [smem:[#allocation2]]
        %v446 = vstv %s445
        %v447 = vadd.f32 %v438, %v446
        %v448 = vadd.f32 %v440, %v446
        %v449 = vadd.f32 %v442, %v446
        %v450 = vadd.f32 %v444, %v446
        %v455 = vlaneseq
        %v456 = vand.u32 %v455, 127
        %v457 = vperm.slane %v447, %v456
        %v458 = vadd.s32 %v456, 4294967288
        %v459 = vperm.slane %v448, %v458
        %vm460 = vcmask 130112
        %v461 = vsel %vm460, %v459, %v457
        %v462 = vadd.s32 %v456, 4294967280
        %v463 = vperm.slane %v449, %v462
        %vm464 = vcmask 195712
        %v465 = vsel %vm464, %v463, %v461
        %v466 = vadd.s32 %v456, 4294967272
        %v467 = vperm.slane %v450, %v466
        %vm468 = vcmask 261312
        %v469 = vsel %vm468, %v467, %v465
        %vm471 = vcmask 253952
        %472 = vst.msk [vmem:[%s272] sm:$0x1] %vm471, %v469
        %s473 = sand.u32 %s182, 1
        %s474 = scalar_lea.sflag [#allocation4], %s473
        %s475 = sand.u32 %s182, 1
        %s476 = scalar_lea.vmem [#allocation3], %s475
        // Predicated region
        $region49: #{tpu_custom_call.1} parent=47 // pred_check
          %p477 = pneg %p192
        $region50: #{tpu_custom_call.1} parent=47 // pred_check_branch
          %479 = sbr.rel (%p477) target = $region52
        $region51: #{tpu_custom_call.1} parent=47 // pred_region
          %481 = vsyncadd %s474, 0
          %s482 = scalar_lea.hbm %s7, %s22
          %s484 = sshll.u32 %s476, 4
          %s485 = int_to_ptr.vmem [resolvable:$true] %s484
          %s486 = sshll.u32 %s482, 4
          %s487 = int_to_ptr.hbm [resolvable:$true] %s486
          %489 = dma.vmem_to_hbm [thread:$0]  %s485, 16, %s487, %s474
        $region52: #{tpu_custom_call.1} parent=47 // pred_fallthru
          _
      $region48: #{tpu_custom_call.1} parent=5 // pred_fallthru
        _
      %p490 = scmp.le.s32.totalorder 2, %s17
      // Predicated region
      $region53: #{tpu_custom_call.1} parent=5 // pred_check
        %p491 = pneg %p490
      $region54: #{tpu_custom_call.1} parent=5 // pred_check_branch
        %493 = sbr.rel (%p491) target = $region56
      $region55: #{tpu_custom_call.1} parent=5 // pred_region
        %s494 = ssub.s32 %s17, 2
        // Predicated region
        $region57: #{tpu_custom_call.1} parent=55 // pred_check
          %p495 = pneg %p198
        $region58: #{tpu_custom_call.1} parent=55 // pred_check_branch
          %497 = sbr.rel (%p495) target = $region60
        $region59: #{tpu_custom_call.1} parent=55 // pred_region
          %s498 = sand.u32 %s183, 1
          %s499 = scalar_lea.sflag [#allocation4], %s498
          %s500 = sand.u32 %s183, 1
          %s501 = scalar_lea.vmem [#allocation3], %s500
          %503 = dma.done %s499, 16
        $region60: #{tpu_custom_call.1} parent=55 // pred_fallthru
          _
      $region56: #{tpu_custom_call.1} parent=5 // pred_fallthru
        _
    $region6: #{tpu_custom_call.1} parent=1 // loop_footer
      %s21 = sadd.s32 1, %s17
    $region7: #{tpu_custom_call.1} parent=1 // loop_footer_branch
      %16 = sbr.rel target = $region3
    $region8: #{tpu_custom_call.1} parent=1 // loop_exit
      _
    %504 = vsyncpa [#allocation4], 1
    %s505 = scalar_lea.sflag [#allocation4], 1
    %506 = vsyncpa %s505, 1

</llo_original>
